<compile_context>
chip_gen: v7x
topology: tpu7x:2x2x1
jax: 0.10.0
libtpu: 0.0.40
codegen_flags: <defaults>
</compile_context>

<pallas_src>
import functools

import jax
import jax.numpy as jnp
from jax.experimental import pallas as pl
from jax.experimental.pallas import tpu as pltpu

_LANES = 128
_SUBLANES = 8


def _pick_row_tile(R, max_rows):
    """Row tile needing no padding: R itself if it fits in one tile, else the
    largest divisor of R that is a multiple of 8 and in [64, max_rows]."""
    if R <= max_rows:
        return R
    start = max_rows - max_rows % _SUBLANES
    floor = max(_SUBLANES, min(64, start))
    for d in range(start, floor - 1, -_SUBLANES):
        if R % d == 0:
            return d
    return None


def _np_branch_kernel(x_ref, t_ref, out_ref, e_ref, *, C, Q_pad, masked):
    # x_ref:   (1, C, TR, 128) float   (any float dtype; cast to f32 per tile)
    # t_ref:   (1, TR, 128)    int32
    # out_ref: (1, 1, Q_pad, 128) f32  (resident accumulator over the row-tile axis)
    # e_ref:   (C, TR, 128)    f32     (scratch: cached exp(x_c - m))
    r = pl.program_id(2)

    @pl.when(r == 0)
    def _init():
        out_ref[...] = jnp.zeros_like(out_ref)

    t = t_ref[0]                                          # (TR, 128) int32
    f32 = jnp.float32

    # ---- pass 1: per-pixel max over channels (unrolled, pure VPU) ----
    m = x_ref[0, 0].astype(f32)
    for c in range(1, C):
        m = jnp.maximum(m, x_ref[0, c].astype(f32))

    # ---- pass 2: exp(x - m) -> scratch, softmax denominator, logit at target ----
    s = jnp.zeros_like(m)
    x_tgt = jnp.zeros_like(m)
    for c in range(C):
        xc = x_ref[0, c].astype(f32)
        ec = jnp.exp(xc - m)
        e_ref[c] = ec                                     # cached, reused in pass 3
        s = s + ec
        x_tgt = x_tgt + jnp.where(t == c, xc, 0.0)

    log_s = jnp.log(s)
    inv_s = pl.reciprocal(s, approx=True)                 # EUP vrcp
    inv_s = inv_s * (2.0 - s * inv_s)                     # one Newton step -> ~f32 exact

    if masked:
        valid = t >= 0                                    # padded pixels carry target = -1
        ce_pix = jnp.where(valid, m + log_s, 0.0) - x_tgt   # x_tgt is already 0 on padding
        inv_s = jnp.where(valid, inv_s, 0.0)              # padded pixels contribute 0 to sum(p_c)
    else:
        ce_pix = (m + log_s) - x_tgt

    # ---- pass 3: per-class dice ingredients, sublane-reduced (lane sum in glue) ----
    inter, sum_p, sum_t = [], [], []
    for c in range(C):
        p_c = e_ref[c] * inv_s                            # softmax prob of class c
        mask_c = (t == c).astype(f32)
        inter.append(jnp.sum(p_c * mask_c, axis=0, keepdims=True))
        sum_p.append(jnp.sum(p_c, axis=0, keepdims=True))
        sum_t.append(jnp.sum(mask_c, axis=0, keepdims=True))
    partials = [jnp.sum(ce_pix, axis=0, keepdims=True)] + inter + sum_p + sum_t

    # Row layout of the (Q_pad, 128) accumulator:
    #   row 0            : CE partial sum
    #   rows 1 .. C      : per-class intersection  sum(p_c * onehot_c)
    #   rows C+1 .. 2C   : per-class sum(p_c)
    #   rows 2C+1 .. 3C  : per-class sum(onehot_c)
    rows = jax.lax.broadcasted_iota(jnp.int32, (Q_pad, _LANES), 0)
    acc = jnp.zeros((Q_pad, _LANES), f32)
    for q, part in enumerate(partials):
        acc = acc + jnp.where(rows == q, part, 0.0)

    out_ref[...] = out_ref[...] + acc.reshape(out_ref.shape)


def np_branch_loss(np_logits, np_targets, smooth=1e-3, rows_per_tile=1024):
    """np_logits: (N, C, H, W) float; np_targets: (N, H, W) integer labels.

    rows_per_tile=1024 targets v6e/v7x (~12 MiB VMEM at C=5); use ~512 on v5e
    (16 MiB default scoped VMEM).
    """
    N, C, H, W = np_logits.shape
    assert C in (2, 5)
    assert np_targets.shape == (N, H, W)
    HW = H * W

    # Free reshapes only; no dtype cast / pad of the logits on the common path.
    logits = np_logits.reshape(N, C, HW)
    targets = np_targets.reshape(N, HW)
    if targets.dtype != jnp.int32:
        targets = targets.astype(jnp.int32)

    R = pl.cdiv(HW, _LANES)
    lane_pad = R * _LANES - HW

    tr = _pick_row_tile(R, rows_per_tile) if lane_pad == 0 else None
    if tr is not None:
        R_pad = R
        masked = False
    else:
        # Rare fallback: ragged lane tail or no usable row divisor -> pad
        # (full-HBM copy). TODO(synk): mask the ragged tail fully in-kernel to
        # avoid this copy as well.
        masked = True
        max_rows = max(_SUBLANES, rows_per_tile - rows_per_tile % _SUBLANES)
        tr = min(max_rows, _SUBLANES * pl.cdiv(R, _SUBLANES))
        R_pad = tr * pl.cdiv(R, tr)
        pad = R_pad * _LANES - HW
        logits = jnp.pad(logits, ((0, 0), (0, 0), (0, pad)))
        targets = jnp.pad(targets, ((0, 0), (0, pad)), constant_values=-1)

    logits = logits.reshape(N, C, R_pad, _LANES)
    targets = targets.reshape(N, R_pad, _LANES)

    n_tiles = R_pad // tr
    # Extra "parallel" split of the spatial tiles: keeps both v7x TensorCores
    # busy when N is small; harmless on single-TC v5e/v6e.
    S = 2 if n_tiles % 2 == 0 else 1
    T = n_tiles // S

    Q = 3 * C + 1
    Q_pad = _SUBLANES * pl.cdiv(Q, _SUBLANES)

    kernel = functools.partial(_np_branch_kernel, C=C, Q_pad=Q_pad, masked=masked)
    out = pl.pallas_call(
        kernel,
        out_shape=jax.ShapeDtypeStruct((N, S, Q_pad, _LANES), jnp.float32),
        grid_spec=pltpu.PrefetchScalarGridSpec(
            num_scalar_prefetch=0,
            grid=(N, S, T),                                # spatial reduction axis last
            in_specs=[
                pl.BlockSpec((1, C, tr, _LANES), lambda n, s, r: (n, 0, s * T + r, 0)),
                pl.BlockSpec((1, tr, _LANES), lambda n, s, r: (n, s * T + r, 0)),
            ],
            out_specs=pl.BlockSpec((1, 1, Q_pad, _LANES), lambda n, s, r: (n, s, 0, 0)),
            scratch_shapes=[pltpu.VMEM((C, tr, _LANES), jnp.float32)],
        ),
        compiler_params=pltpu.CompilerParams(
            dimension_semantics=("parallel", "parallel", "arbitrary")),
    )(logits, targets)

    # ---- glue: combine per-(n,c) reductions into the scalar loss ----
    sums = jnp.sum(out, axis=(1, 3))                       # fold TC-split + lanes -> (N, Q_pad)
    ce_sum = sums[:, 0]
    inter = sums[:, 1:1 + C]
    s_in = sums[:, 1 + C:1 + 2 * C]
    s_tg = sums[:, 1 + 2 * C:1 + 3 * C]

    ce = jnp.sum(ce_sum) / (N * HW)                        # NLLLoss(reduction='mean')
    ratio = (2.0 * inter + smooth) / (s_in + s_tg + smooth)
    dice = jnp.sum(1.0 - jnp.mean(ratio, axis=0)) / C      # DiceCoeff
    return ce + dice


def _ref_loss(np_logits, np_targets, smooth=1e-3):
    """Pure-JAX reference of the PyTorch forward, for sanity check."""
    N, C, H, W = np_logits.shape
    logp = jax.nn.log_softmax(np_logits, axis=1)
    p = jax.nn.softmax(np_logits, axis=1)
    onehot = jax.nn.one_hot(np_targets, C, axis=1, dtype=jnp.float32)
    ce = -jnp.mean(jnp.sum(onehot * logp, axis=1))
    inp = p.reshape(N, C, -1)
    tgt = onehot.reshape(N, C, -1)
    inter = jnp.sum(inp * tgt, axis=2)
    ratio = (2.0 * inter + smooth) / (jnp.sum(inp, axis=2) + jnp.sum(tgt, axis=2) + smooth)
    dice = jnp.sum(1.0 - jnp.mean(ratio, axis=0)) / C
    return ce + dice


if __name__ == "__main__":
    key = jax.random.PRNGKey(0)

    # main check: the module's canonical small shape (no padding, single tile)
    k1, k2, key = jax.random.split(key, 3)
    N, C, H, W = 2, 5, 16, 16
    np_logits = jax.random.normal(k1, (N, C, H, W), dtype=jnp.float32)
    np_targets = jax.random.randint(k2, (N, H, W), 0, C, dtype=jnp.int32)
    loss = jax.block_until_ready(np_branch_loss(np_logits, np_targets))
    ref = jax.block_until_ready(_ref_loss(np_logits, np_targets))
    assert jnp.allclose(loss, ref, rtol=1e-5, atol=1e-5), (loss, ref)

    # ragged spatial size (exercises the masked / padded fallback path), C=2
    k1, k2, key = jax.random.split(key, 3)
    lg = jax.random.normal(k1, (2, 2, 18, 20), dtype=jnp.float32)
    tg = jax.random.randint(k2, (2, 18, 20), 0, 2, dtype=jnp.int32)
    l2 = jax.block_until_ready(np_branch_loss(lg, tg))
    r2 = jax.block_until_ready(_ref_loss(lg, tg))
    assert jnp.allclose(l2, r2, rtol=1e-5, atol=1e-5), (l2, r2)

    # multi-tile accumulation + dual-core split path (small rows_per_tile forces it)
    k1, k2, key = jax.random.split(key, 3)
    lg = jax.random.normal(k1, (2, 5, 128, 128), dtype=jnp.float32)
    tg = jax.random.randint(k2, (2, 128, 128), 0, 5, dtype=jnp.int32)
    l3 = jax.block_until_ready(np_branch_loss(lg, tg, rows_per_tile=32))
    r3 = jax.block_until_ready(_ref_loss(lg, tg))
    assert jnp.allclose(l3, r3, rtol=1e-4, atol=1e-4), (l3, r3)

    print("KERNEL_OK")
</pallas_src>

<mosaic_0001>
module attributes {stable_mosaic.version = 11 : i64} {
  func.func @_np_branch_kernel(%arg0: i32, %arg1: i32, %arg2: i32, %arg3: memref<1x5x2x128xf32, #tpu.memory_space<vmem>>, %arg4: memref<1x2x128xi32, #tpu.memory_space<vmem>>, %arg5: memref<1x1x16x128xf32, #tpu.memory_space<vmem>>, %arg6: memref<5x2x128xf32, #tpu.memory_space<vmem>>) attributes {dimension_semantics = [#tpu.dimension_semantics<parallel>, #tpu.dimension_semantics<parallel>, #tpu.dimension_semantics<arbitrary>], iteration_bounds = array<i64: 2, 1, 1>, scalar_prefetch = 0 : i64, scratch_operands = 1 : i64, tpu.core_type = #tpu.core_type<tc>, window_params = [{transform_indices = @transform_0, window_bounds = array<i64: 1, 5, 2, 128>}, {transform_indices = @transform_1, window_bounds = array<i64: 1, 2, 128>}, {transform_indices = @transform_2, window_bounds = array<i64: 1, 1, 16, 128>}]} {
    %c0_i32 = arith.constant 0 : i32
    %0 = arith.cmpi eq, %arg2, %c0_i32 : i32
    %1 = arith.extui %0 : i1 to i32
    %c0_i32_0 = arith.constant 0 : i32
    %2 = arith.cmpi ne, %1, %c0_i32_0 : i32
    scf.if %2 {
      %cst_128 = arith.constant 0.000000e+00 : f32
      %284 = vector.broadcast %cst_128 : f32 to vector<1x1x16x128xf32>
      %c0_129 = arith.constant 0 : index
      %c0_130 = arith.constant 0 : index
      %c0_131 = arith.constant 0 : index
      %c0_132 = arith.constant 0 : index
      %285 = vector.load %arg5[%c0_129, %c0_130, %c0_131, %c0_132] : memref<1x1x16x128xf32, #tpu.memory_space<vmem>>, vector<1x1x16x128xf32>
      tpu.vector_store %arg5[%c0_129, %c0_130, %c0_131, %c0_132], %284 {strides = array<i32>} : memref<1x1x16x128xf32, #tpu.memory_space<vmem>>, vector<1x1x16x128xf32>,
    } else {
    }
    %c0 = arith.constant 0 : index
    %c0_1 = arith.constant 0 : index
    %c0_2 = arith.constant 0 : index
    %3 = vector.load %arg4[%c0, %c0_1, %c0_2] : memref<1x2x128xi32, #tpu.memory_space<vmem>>, vector<1x2x128xi32>
    %4 = vector.shape_cast %3 : vector<1x2x128xi32> to vector<2x128xi32>
    %c0_3 = arith.constant 0 : index
    %c0_4 = arith.constant 0 : index
    %c0_5 = arith.constant 0 : index
    %c0_6 = arith.constant 0 : index
    %5 = vector.load %arg3[%c0_3, %c0_4, %c0_5, %c0_6] : memref<1x5x2x128xf32, #tpu.memory_space<vmem>>, vector<1x1x2x128xf32>
    %6 = vector.shape_cast %5 : vector<1x1x2x128xf32> to vector<2x128xf32>
    %c0_7 = arith.constant 0 : index
    %c1 = arith.constant 1 : index
    %c0_8 = arith.constant 0 : index
    %c0_9 = arith.constant 0 : index
    %7 = vector.load %arg3[%c0_7, %c1, %c0_8, %c0_9] : memref<1x5x2x128xf32, #tpu.memory_space<vmem>>, vector<1x1x2x128xf32>
    %8 = vector.shape_cast %7 : vector<1x1x2x128xf32> to vector<2x128xf32>
    %9 = arith.maximumf %6, %8 : vector<2x128xf32>
    %c0_10 = arith.constant 0 : index
    %c2 = arith.constant 2 : index
    %c0_11 = arith.constant 0 : index
    %c0_12 = arith.constant 0 : index
    %10 = vector.load %arg3[%c0_10, %c2, %c0_11, %c0_12] : memref<1x5x2x128xf32, #tpu.memory_space<vmem>>, vector<1x1x2x128xf32>
    %11 = vector.shape_cast %10 : vector<1x1x2x128xf32> to vector<2x128xf32>
    %12 = arith.maximumf %9, %11 : vector<2x128xf32>
    %c0_13 = arith.constant 0 : index
    %c3 = arith.constant 3 : index
    %c0_14 = arith.constant 0 : index
    %c0_15 = arith.constant 0 : index
    %13 = vector.load %arg3[%c0_13, %c3, %c0_14, %c0_15] : memref<1x5x2x128xf32, #tpu.memory_space<vmem>>, vector<1x1x2x128xf32>
    %14 = vector.shape_cast %13 : vector<1x1x2x128xf32> to vector<2x128xf32>
    %15 = arith.maximumf %12, %14 : vector<2x128xf32>
    %c0_16 = arith.constant 0 : index
    %c4 = arith.constant 4 : index
    %c0_17 = arith.constant 0 : index
    %c0_18 = arith.constant 0 : index
    %16 = vector.load %arg3[%c0_16, %c4, %c0_17, %c0_18] : memref<1x5x2x128xf32, #tpu.memory_space<vmem>>, vector<1x1x2x128xf32>
    %17 = vector.shape_cast %16 : vector<1x1x2x128xf32> to vector<2x128xf32>
    %18 = arith.maximumf %15, %17 : vector<2x128xf32>
    %cst = arith.constant 0.000000e+00 : f32
    %19 = vector.broadcast %cst : f32 to vector<2x128xf32>
    %cst_19 = arith.constant 0.000000e+00 : f32
    %20 = vector.broadcast %cst_19 : f32 to vector<2x128xf32>
    %c0_20 = arith.constant 0 : index
    %c0_21 = arith.constant 0 : index
    %c0_22 = arith.constant 0 : index
    %c0_23 = arith.constant 0 : index
    %21 = vector.load %arg3[%c0_20, %c0_21, %c0_22, %c0_23] : memref<1x5x2x128xf32, #tpu.memory_space<vmem>>, vector<1x1x2x128xf32>
    %22 = vector.shape_cast %21 : vector<1x1x2x128xf32> to vector<2x128xf32>
    %23 = arith.subf %22, %18 : vector<2x128xf32>
    %24 = math.exp %23 : vector<2x128xf32>
    %c0_24 = arith.constant 0 : index
    %c0_25 = arith.constant 0 : index
    %c0_26 = arith.constant 0 : index
    %25 = vector.load %arg6[%c0_24, %c0_25, %c0_26] : memref<5x2x128xf32, #tpu.memory_space<vmem>>, vector<1x2x128xf32>
    %26 = vector.shape_cast %25 : vector<1x2x128xf32> to vector<2x128xf32>
    %27 = vector.shape_cast %24 : vector<2x128xf32> to vector<1x2x128xf32>
    tpu.vector_store %arg6[%c0_24, %c0_25, %c0_26], %27 {strides = array<i32>} : memref<5x2x128xf32, #tpu.memory_space<vmem>>, vector<1x2x128xf32>,
    %28 = arith.addf %19, %24 : vector<2x128xf32>
    %c0_i32_27 = arith.constant 0 : i32
    %29 = vector.broadcast %c0_i32_27 : i32 to vector<2x128xi32>
    %30 = arith.cmpi eq, %4, %29 : vector<2x128xi32>
    %cst_28 = arith.constant 0.000000e+00 : f32
    %31 = vector.broadcast %cst_28 : f32 to vector<2x128xf32>
    %32 = arith.select %30, %22, %31 : vector<2x128xi1>, vector<2x128xf32>
    %33 = arith.addf %20, %32 : vector<2x128xf32>
    %c0_29 = arith.constant 0 : index
    %c1_30 = arith.constant 1 : index
    %c0_31 = arith.constant 0 : index
    %c0_32 = arith.constant 0 : index
    %34 = vector.load %arg3[%c0_29, %c1_30, %c0_31, %c0_32] : memref<1x5x2x128xf32, #tpu.memory_space<vmem>>, vector<1x1x2x128xf32>
    %35 = vector.shape_cast %34 : vector<1x1x2x128xf32> to vector<2x128xf32>
    %36 = arith.subf %35, %18 : vector<2x128xf32>
    %37 = math.exp %36 : vector<2x128xf32>
    %c1_33 = arith.constant 1 : index
    %c0_34 = arith.constant 0 : index
    %c0_35 = arith.constant 0 : index
    %38 = vector.load %arg6[%c1_33, %c0_34, %c0_35] : memref<5x2x128xf32, #tpu.memory_space<vmem>>, vector<1x2x128xf32>
    %39 = vector.shape_cast %38 : vector<1x2x128xf32> to vector<2x128xf32>
    %40 = vector.shape_cast %37 : vector<2x128xf32> to vector<1x2x128xf32>
    tpu.vector_store %arg6[%c1_33, %c0_34, %c0_35], %40 {strides = array<i32>} : memref<5x2x128xf32, #tpu.memory_space<vmem>>, vector<1x2x128xf32>,
    %41 = arith.addf %28, %37 : vector<2x128xf32>
    %c1_i32 = arith.constant 1 : i32
    %42 = vector.broadcast %c1_i32 : i32 to vector<2x128xi32>
    %43 = arith.cmpi eq, %4, %42 : vector<2x128xi32>
    %cst_36 = arith.constant 0.000000e+00 : f32
    %44 = vector.broadcast %cst_36 : f32 to vector<2x128xf32>
    %45 = arith.select %43, %35, %44 : vector<2x128xi1>, vector<2x128xf32>
    %46 = arith.addf %33, %45 : vector<2x128xf32>
    %c0_37 = arith.constant 0 : index
    %c2_38 = arith.constant 2 : index
    %c0_39 = arith.constant 0 : index
    %c0_40 = arith.constant 0 : index
    %47 = vector.load %arg3[%c0_37, %c2_38, %c0_39, %c0_40] : memref<1x5x2x128xf32, #tpu.memory_space<vmem>>, vector<1x1x2x128xf32>
    %48 = vector.shape_cast %47 : vector<1x1x2x128xf32> to vector<2x128xf32>
    %49 = arith.subf %48, %18 : vector<2x128xf32>
    %50 = math.exp %49 : vector<2x128xf32>
    %c2_41 = arith.constant 2 : index
    %c0_42 = arith.constant 0 : index
    %c0_43 = arith.constant 0 : index
    %51 = vector.load %arg6[%c2_41, %c0_42, %c0_43] : memref<5x2x128xf32, #tpu.memory_space<vmem>>, vector<1x2x128xf32>
    %52 = vector.shape_cast %51 : vector<1x2x128xf32> to vector<2x128xf32>
    %53 = vector.shape_cast %50 : vector<2x128xf32> to vector<1x2x128xf32>
    tpu.vector_store %arg6[%c2_41, %c0_42, %c0_43], %53 {strides = array<i32>} : memref<5x2x128xf32, #tpu.memory_space<vmem>>, vector<1x2x128xf32>,
    %54 = arith.addf %41, %50 : vector<2x128xf32>
    %c2_i32 = arith.constant 2 : i32
    %55 = vector.broadcast %c2_i32 : i32 to vector<2x128xi32>
    %56 = arith.cmpi eq, %4, %55 : vector<2x128xi32>
    %cst_44 = arith.constant 0.000000e+00 : f32
    %57 = vector.broadcast %cst_44 : f32 to vector<2x128xf32>
    %58 = arith.select %56, %48, %57 : vector<2x128xi1>, vector<2x128xf32>
    %59 = arith.addf %46, %58 : vector<2x128xf32>
    %c0_45 = arith.constant 0 : index
    %c3_46 = arith.constant 3 : index
    %c0_47 = arith.constant 0 : index
    %c0_48 = arith.constant 0 : index
    %60 = vector.load %arg3[%c0_45, %c3_46, %c0_47, %c0_48] : memref<1x5x2x128xf32, #tpu.memory_space<vmem>>, vector<1x1x2x128xf32>
    %61 = vector.shape_cast %60 : vector<1x1x2x128xf32> to vector<2x128xf32>
    %62 = arith.subf %61, %18 : vector<2x128xf32>
    %63 = math.exp %62 : vector<2x128xf32>
    %c3_49 = arith.constant 3 : index
    %c0_50 = arith.constant 0 : index
    %c0_51 = arith.constant 0 : index
    %64 = vector.load %arg6[%c3_49, %c0_50, %c0_51] : memref<5x2x128xf32, #tpu.memory_space<vmem>>, vector<1x2x128xf32>
    %65 = vector.shape_cast %64 : vector<1x2x128xf32> to vector<2x128xf32>
    %66 = vector.shape_cast %63 : vector<2x128xf32> to vector<1x2x128xf32>
    tpu.vector_store %arg6[%c3_49, %c0_50, %c0_51], %66 {strides = array<i32>} : memref<5x2x128xf32, #tpu.memory_space<vmem>>, vector<1x2x128xf32>,
    %67 = arith.addf %54, %63 : vector<2x128xf32>
    %c3_i32 = arith.constant 3 : i32
    %68 = vector.broadcast %c3_i32 : i32 to vector<2x128xi32>
    %69 = arith.cmpi eq, %4, %68 : vector<2x128xi32>
    %cst_52 = arith.constant 0.000000e+00 : f32
    %70 = vector.broadcast %cst_52 : f32 to vector<2x128xf32>
    %71 = arith.select %69, %61, %70 : vector<2x128xi1>, vector<2x128xf32>
    %72 = arith.addf %59, %71 : vector<2x128xf32>
    %c0_53 = arith.constant 0 : index
    %c4_54 = arith.constant 4 : index
    %c0_55 = arith.constant 0 : index
    %c0_56 = arith.constant 0 : index
    %73 = vector.load %arg3[%c0_53, %c4_54, %c0_55, %c0_56] : memref<1x5x2x128xf32, #tpu.memory_space<vmem>>, vector<1x1x2x128xf32>
    %74 = vector.shape_cast %73 : vector<1x1x2x128xf32> to vector<2x128xf32>
    %75 = arith.subf %74, %18 : vector<2x128xf32>
    %76 = math.exp %75 : vector<2x128xf32>
    %c4_57 = arith.constant 4 : index
    %c0_58 = arith.constant 0 : index
    %c0_59 = arith.constant 0 : index
    %77 = vector.load %arg6[%c4_57, %c0_58, %c0_59] : memref<5x2x128xf32, #tpu.memory_space<vmem>>, vector<1x2x128xf32>
    %78 = vector.shape_cast %77 : vector<1x2x128xf32> to vector<2x128xf32>
    %79 = vector.shape_cast %76 : vector<2x128xf32> to vector<1x2x128xf32>
    tpu.vector_store %arg6[%c4_57, %c0_58, %c0_59], %79 {strides = array<i32>} : memref<5x2x128xf32, #tpu.memory_space<vmem>>, vector<1x2x128xf32>,
    %80 = arith.addf %67, %76 : vector<2x128xf32>
    %c4_i32 = arith.constant 4 : i32
    %81 = vector.broadcast %c4_i32 : i32 to vector<2x128xi32>
    %82 = arith.cmpi eq, %4, %81 : vector<2x128xi32>
    %cst_60 = arith.constant 0.000000e+00 : f32
    %83 = vector.broadcast %cst_60 : f32 to vector<2x128xf32>
    %84 = arith.select %82, %74, %83 : vector<2x128xi1>, vector<2x128xf32>
    %85 = arith.addf %72, %84 : vector<2x128xf32>
    %86 = math.log %80 : vector<2x128xf32>
    %87 = tpu.reciprocal %80 {approx = true} : vector<2x128xf32> -> vector<2x128xf32>
    %88 = arith.mulf %80, %87 : vector<2x128xf32>
    %cst_61 = arith.constant 2.000000e+00 : f32
    %89 = vector.broadcast %cst_61 : f32 to vector<2x128xf32>
    %90 = arith.subf %89, %88 : vector<2x128xf32>
    %91 = arith.mulf %87, %90 : vector<2x128xf32>
    %92 = arith.addf %18, %86 : vector<2x128xf32>
    %93 = arith.subf %92, %85 : vector<2x128xf32>
    %c0_62 = arith.constant 0 : index
    %c0_63 = arith.constant 0 : index
    %c0_64 = arith.constant 0 : index
    %94 = vector.load %arg6[%c0_62, %c0_63, %c0_64] : memref<5x2x128xf32, #tpu.memory_space<vmem>>, vector<1x2x128xf32>
    %95 = vector.shape_cast %94 : vector<1x2x128xf32> to vector<2x128xf32>
    %96 = arith.mulf %95, %91 : vector<2x128xf32>
    %c0_i32_65 = arith.constant 0 : i32
    %97 = vector.broadcast %c0_i32_65 : i32 to vector<2x128xi32>
    %98 = arith.cmpi eq, %4, %97 : vector<2x128xi32>
    %99 = arith.extui %98 : vector<2x128xi1> to vector<2x128xi32>
    %100 = arith.sitofp %99 : vector<2x128xi32> to vector<2x128xf32>
    %101 = arith.mulf %96, %100 : vector<2x128xf32>
    %cst_66 = arith.constant dense<0.000000e+00> : vector<128xf32>
    %102 = vector.multi_reduction <add>, %101, %cst_66 [0] : vector<2x128xf32> to vector<128xf32>
    %103 = vector.shape_cast %102 : vector<128xf32> to vector<1x128xf32>
    %cst_67 = arith.constant dense<0.000000e+00> : vector<128xf32>
    %104 = vector.multi_reduction <add>, %96, %cst_67 [0] : vector<2x128xf32> to vector<128xf32>
    %105 = vector.shape_cast %104 : vector<128xf32> to vector<1x128xf32>
    %cst_68 = arith.constant dense<0.000000e+00> : vector<128xf32>
    %106 = vector.multi_reduction <add>, %100, %cst_68 [0] : vector<2x128xf32> to vector<128xf32>
    %107 = vector.shape_cast %106 : vector<128xf32> to vector<1x128xf32>
    %c1_69 = arith.constant 1 : index
    %c0_70 = arith.constant 0 : index
    %c0_71 = arith.constant 0 : index
    %108 = vector.load %arg6[%c1_69, %c0_70, %c0_71] : memref<5x2x128xf32, #tpu.memory_space<vmem>>, vector<1x2x128xf32>
    %109 = vector.shape_cast %108 : vector<1x2x128xf32> to vector<2x128xf32>
    %110 = arith.mulf %109, %91 : vector<2x128xf32>
    %c1_i32_72 = arith.constant 1 : i32
    %111 = vector.broadcast %c1_i32_72 : i32 to vector<2x128xi32>
    %112 = arith.cmpi eq, %4, %111 : vector<2x128xi32>
    %113 = arith.extui %112 : vector<2x128xi1> to vector<2x128xi32>
    %114 = arith.sitofp %113 : vector<2x128xi32> to vector<2x128xf32>
    %115 = arith.mulf %110, %114 : vector<2x128xf32>
    %cst_73 = arith.constant dense<0.000000e+00> : vector<128xf32>
    %116 = vector.multi_reduction <add>, %115, %cst_73 [0] : vector<2x128xf32> to vector<128xf32>
    %117 = vector.shape_cast %116 : vector<128xf32> to vector<1x128xf32>
    %cst_74 = arith.constant dense<0.000000e+00> : vector<128xf32>
    %118 = vector.multi_reduction <add>, %110, %cst_74 [0] : vector<2x128xf32> to vector<128xf32>
    %119 = vector.shape_cast %118 : vector<128xf32> to vector<1x128xf32>
    %cst_75 = arith.constant dense<0.000000e+00> : vector<128xf32>
    %120 = vector.multi_reduction <add>, %114, %cst_75 [0] : vector<2x128xf32> to vector<128xf32>
    %121 = vector.shape_cast %120 : vector<128xf32> to vector<1x128xf32>
    %c2_76 = arith.constant 2 : index
    %c0_77 = arith.constant 0 : index
    %c0_78 = arith.constant 0 : index
    %122 = vector.load %arg6[%c2_76, %c0_77, %c0_78] : memref<5x2x128xf32, #tpu.memory_space<vmem>>, vector<1x2x128xf32>
    %123 = vector.shape_cast %122 : vector<1x2x128xf32> to vector<2x128xf32>
    %124 = arith.mulf %123, %91 : vector<2x128xf32>
    %c2_i32_79 = arith.constant 2 : i32
    %125 = vector.broadcast %c2_i32_79 : i32 to vector<2x128xi32>
    %126 = arith.cmpi eq, %4, %125 : vector<2x128xi32>
    %127 = arith.extui %126 : vector<2x128xi1> to vector<2x128xi32>
    %128 = arith.sitofp %127 : vector<2x128xi32> to vector<2x128xf32>
    %129 = arith.mulf %124, %128 : vector<2x128xf32>
    %cst_80 = arith.constant dense<0.000000e+00> : vector<128xf32>
    %130 = vector.multi_reduction <add>, %129, %cst_80 [0] : vector<2x128xf32> to vector<128xf32>
    %131 = vector.shape_cast %130 : vector<128xf32> to vector<1x128xf32>
    %cst_81 = arith.constant dense<0.000000e+00> : vector<128xf32>
    %132 = vector.multi_reduction <add>, %124, %cst_81 [0] : vector<2x128xf32> to vector<128xf32>
    %133 = vector.shape_cast %132 : vector<128xf32> to vector<1x128xf32>
    %cst_82 = arith.constant dense<0.000000e+00> : vector<128xf32>
    %134 = vector.multi_reduction <add>, %128, %cst_82 [0] : vector<2x128xf32> to vector<128xf32>
    %135 = vector.shape_cast %134 : vector<128xf32> to vector<1x128xf32>
    %c3_83 = arith.constant 3 : index
    %c0_84 = arith.constant 0 : index
    %c0_85 = arith.constant 0 : index
    %136 = vector.load %arg6[%c3_83, %c0_84, %c0_85] : memref<5x2x128xf32, #tpu.memory_space<vmem>>, vector<1x2x128xf32>
    %137 = vector.shape_cast %136 : vector<1x2x128xf32> to vector<2x128xf32>
    %138 = arith.mulf %137, %91 : vector<2x128xf32>
    %c3_i32_86 = arith.constant 3 : i32
    %139 = vector.broadcast %c3_i32_86 : i32 to vector<2x128xi32>
    %140 = arith.cmpi eq, %4, %139 : vector<2x128xi32>
    %141 = arith.extui %140 : vector<2x128xi1> to vector<2x128xi32>
    %142 = arith.sitofp %141 : vector<2x128xi32> to vector<2x128xf32>
    %143 = arith.mulf %138, %142 : vector<2x128xf32>
    %cst_87 = arith.constant dense<0.000000e+00> : vector<128xf32>
    %144 = vector.multi_reduction <add>, %143, %cst_87 [0] : vector<2x128xf32> to vector<128xf32>
    %145 = vector.shape_cast %144 : vector<128xf32> to vector<1x128xf32>
    %cst_88 = arith.constant dense<0.000000e+00> : vector<128xf32>
    %146 = vector.multi_reduction <add>, %138, %cst_88 [0] : vector<2x128xf32> to vector<128xf32>
    %147 = vector.shape_cast %146 : vector<128xf32> to vector<1x128xf32>
    %cst_89 = arith.constant dense<0.000000e+00> : vector<128xf32>
    %148 = vector.multi_reduction <add>, %142, %cst_89 [0] : vector<2x128xf32> to vector<128xf32>
    %149 = vector.shape_cast %148 : vector<128xf32> to vector<1x128xf32>
    %c4_90 = arith.constant 4 : index
    %c0_91 = arith.constant 0 : index
    %c0_92 = arith.constant 0 : index
    %150 = vector.load %arg6[%c4_90, %c0_91, %c0_92] : memref<5x2x128xf32, #tpu.memory_space<vmem>>, vector<1x2x128xf32>
    %151 = vector.shape_cast %150 : vector<1x2x128xf32> to vector<2x128xf32>
    %152 = arith.mulf %151, %91 : vector<2x128xf32>
    %c4_i32_93 = arith.constant 4 : i32
    %153 = vector.broadcast %c4_i32_93 : i32 to vector<2x128xi32>
    %154 = arith.cmpi eq, %4, %153 : vector<2x128xi32>
    %155 = arith.extui %154 : vector<2x128xi1> to vector<2x128xi32>
    %156 = arith.sitofp %155 : vector<2x128xi32> to vector<2x128xf32>
    %157 = arith.mulf %152, %156 : vector<2x128xf32>
    %cst_94 = arith.constant dense<0.000000e+00> : vector<128xf32>
    %158 = vector.multi_reduction <add>, %157, %cst_94 [0] : vector<2x128xf32> to vector<128xf32>
    %159 = vector.shape_cast %158 : vector<128xf32> to vector<1x128xf32>
    %cst_95 = arith.constant dense<0.000000e+00> : vector<128xf32>
    %160 = vector.multi_reduction <add>, %152, %cst_95 [0] : vector<2x128xf32> to vector<128xf32>
    %161 = vector.shape_cast %160 : vector<128xf32> to vector<1x128xf32>
    %cst_96 = arith.constant dense<0.000000e+00> : vector<128xf32>
    %162 = vector.multi_reduction <add>, %156, %cst_96 [0] : vector<2x128xf32> to vector<128xf32>
    %163 = vector.shape_cast %162 : vector<128xf32> to vector<1x128xf32>
    %cst_97 = arith.constant dense<0.000000e+00> : vector<128xf32>
    %164 = vector.multi_reduction <add>, %93, %cst_97 [0] : vector<2x128xf32> to vector<128xf32>
    %165 = vector.shape_cast %164 : vector<128xf32> to vector<1x128xf32>
    %166 = tpu.iota {dimensions = array<i32: 0>} : vector<16x128xi32>
    %cst_98 = arith.constant 0.000000e+00 : f32
    %167 = vector.broadcast %cst_98 : f32 to vector<16x128xf32>
    %c0_i32_99 = arith.constant 0 : i32
    %168 = vector.broadcast %c0_i32_99 : i32 to vector<16x128xi32>
    %169 = arith.cmpi eq, %166, %168 : vector<16x128xi32>
    %cst_100 = arith.constant 0.000000e+00 : f32
    %170 = vector.shape_cast %165 : vector<1x128xf32> to vector<1x128xf32>
    %171 = vector.broadcast %170 : vector<1x128xf32> to vector<16x128xf32>
    %172 = vector.broadcast %cst_100 : f32 to vector<16x128xf32>
    %173 = arith.select %169, %171, %172 : vector<16x128xi1>, vector<16x128xf32>
    %174 = arith.addf %167, %173 : vector<16x128xf32>
    %c1_i32_101 = arith.constant 1 : i32
    %175 = vector.broadcast %c1_i32_101 : i32 to vector<16x128xi32>
    %176 = arith.cmpi eq, %166, %175 : vector<16x128xi32>
    %cst_102 = arith.constant 0.000000e+00 : f32
    %177 = vector.shape_cast %103 : vector<1x128xf32> to vector<1x128xf32>
    %178 = vector.broadcast %177 : vector<1x128xf32> to vector<16x128xf32>
    %179 = vector.broadcast %cst_102 : f32 to vector<16x128xf32>
    %180 = arith.select %176, %178, %179 : vector<16x128xi1>, vector<16x128xf32>
    %181 = arith.addf %174, %180 : vector<16x128xf32>
    %c2_i32_103 = arith.constant 2 : i32
    %182 = vector.broadcast %c2_i32_103 : i32 to vector<16x128xi32>
    %183 = arith.cmpi eq, %166, %182 : vector<16x128xi32>
    %cst_104 = arith.constant 0.000000e+00 : f32
    %184 = vector.shape_cast %117 : vector<1x128xf32> to vector<1x128xf32>
    %185 = vector.broadcast %184 : vector<1x128xf32> to vector<16x128xf32>
    %186 = vector.broadcast %cst_104 : f32 to vector<16x128xf32>
    %187 = arith.select %183, %185, %186 : vector<16x128xi1>, vector<16x128xf32>
    %188 = arith.addf %181, %187 : vector<16x128xf32>
    %c3_i32_105 = arith.constant 3 : i32
    %189 = vector.broadcast %c3_i32_105 : i32 to vector<16x128xi32>
    %190 = arith.cmpi eq, %166, %189 : vector<16x128xi32>
    %cst_106 = arith.constant 0.000000e+00 : f32
    %191 = vector.shape_cast %131 : vector<1x128xf32> to vector<1x128xf32>
    %192 = vector.broadcast %191 : vector<1x128xf32> to vector<16x128xf32>
    %193 = vector.broadcast %cst_106 : f32 to vector<16x128xf32>
    %194 = arith.select %190, %192, %193 : vector<16x128xi1>, vector<16x128xf32>
    %195 = arith.addf %188, %194 : vector<16x128xf32>
    %c4_i32_107 = arith.constant 4 : i32
    %196 = vector.broadcast %c4_i32_107 : i32 to vector<16x128xi32>
    %197 = arith.cmpi eq, %166, %196 : vector<16x128xi32>
    %cst_108 = arith.constant 0.000000e+00 : f32
    %198 = vector.shape_cast %145 : vector<1x128xf32> to vector<1x128xf32>
    %199 = vector.broadcast %198 : vector<1x128xf32> to vector<16x128xf32>
    %200 = vector.broadcast %cst_108 : f32 to vector<16x128xf32>
    %201 = arith.select %197, %199, %200 : vector<16x128xi1>, vector<16x128xf32>
    %202 = arith.addf %195, %201 : vector<16x128xf32>
    %c5_i32 = arith.constant 5 : i32
    %203 = vector.broadcast %c5_i32 : i32 to vector<16x128xi32>
    %204 = arith.cmpi eq, %166, %203 : vector<16x128xi32>
    %cst_109 = arith.constant 0.000000e+00 : f32
    %205 = vector.shape_cast %159 : vector<1x128xf32> to vector<1x128xf32>
    %206 = vector.broadcast %205 : vector<1x128xf32> to vector<16x128xf32>
    %207 = vector.broadcast %cst_109 : f32 to vector<16x128xf32>
    %208 = arith.select %204, %206, %207 : vector<16x128xi1>, vector<16x128xf32>
    %209 = arith.addf %202, %208 : vector<16x128xf32>
    %c6_i32 = arith.constant 6 : i32
    %210 = vector.broadcast %c6_i32 : i32 to vector<16x128xi32>
    %211 = arith.cmpi eq, %166, %210 : vector<16x128xi32>
    %cst_110 = arith.constant 0.000000e+00 : f32
    %212 = vector.shape_cast %105 : vector<1x128xf32> to vector<1x128xf32>
    %213 = vector.broadcast %212 : vector<1x128xf32> to vector<16x128xf32>
    %214 = vector.broadcast %cst_110 : f32 to vector<16x128xf32>
    %215 = arith.select %211, %213, %214 : vector<16x128xi1>, vector<16x128xf32>
    %216 = arith.addf %209, %215 : vector<16x128xf32>
    %c7_i32 = arith.constant 7 : i32
    %217 = vector.broadcast %c7_i32 : i32 to vector<16x128xi32>
    %218 = arith.cmpi eq, %166, %217 : vector<16x128xi32>
    %cst_111 = arith.constant 0.000000e+00 : f32
    %219 = vector.shape_cast %119 : vector<1x128xf32> to vector<1x128xf32>
    %220 = vector.broadcast %219 : vector<1x128xf32> to vector<16x128xf32>
    %221 = vector.broadcast %cst_111 : f32 to vector<16x128xf32>
    %222 = arith.select %218, %220, %221 : vector<16x128xi1>, vector<16x128xf32>
    %223 = arith.addf %216, %222 : vector<16x128xf32>
    %c8_i32 = arith.constant 8 : i32
    %224 = vector.broadcast %c8_i32 : i32 to vector<16x128xi32>
    %225 = arith.cmpi eq, %166, %224 : vector<16x128xi32>
    %cst_112 = arith.constant 0.000000e+00 : f32
    %226 = vector.shape_cast %133 : vector<1x128xf32> to vector<1x128xf32>
    %227 = vector.broadcast %226 : vector<1x128xf32> to vector<16x128xf32>
    %228 = vector.broadcast %cst_112 : f32 to vector<16x128xf32>
    %229 = arith.select %225, %227, %228 : vector<16x128xi1>, vector<16x128xf32>
    %230 = arith.addf %223, %229 : vector<16x128xf32>
    %c9_i32 = arith.constant 9 : i32
    %231 = vector.broadcast %c9_i32 : i32 to vector<16x128xi32>
    %232 = arith.cmpi eq, %166, %231 : vector<16x128xi32>
    %cst_113 = arith.constant 0.000000e+00 : f32
    %233 = vector.shape_cast %147 : vector<1x128xf32> to vector<1x128xf32>
    %234 = vector.broadcast %233 : vector<1x128xf32> to vector<16x128xf32>
    %235 = vector.broadcast %cst_113 : f32 to vector<16x128xf32>
    %236 = arith.select %232, %234, %235 : vector<16x128xi1>, vector<16x128xf32>
    %237 = arith.addf %230, %236 : vector<16x128xf32>
    %c10_i32 = arith.constant 10 : i32
    %238 = vector.broadcast %c10_i32 : i32 to vector<16x128xi32>
    %239 = arith.cmpi eq, %166, %238 : vector<16x128xi32>
    %cst_114 = arith.constant 0.000000e+00 : f32
    %240 = vector.shape_cast %161 : vector<1x128xf32> to vector<1x128xf32>
    %241 = vector.broadcast %240 : vector<1x128xf32> to vector<16x128xf32>
    %242 = vector.broadcast %cst_114 : f32 to vector<16x128xf32>
    %243 = arith.select %239, %241, %242 : vector<16x128xi1>, vector<16x128xf32>
    %244 = arith.addf %237, %243 : vector<16x128xf32>
    %c11_i32 = arith.constant 11 : i32
    %245 = vector.broadcast %c11_i32 : i32 to vector<16x128xi32>
    %246 = arith.cmpi eq, %166, %245 : vector<16x128xi32>
    %cst_115 = arith.constant 0.000000e+00 : f32
    %247 = vector.shape_cast %107 : vector<1x128xf32> to vector<1x128xf32>
    %248 = vector.broadcast %247 : vector<1x128xf32> to vector<16x128xf32>
    %249 = vector.broadcast %cst_115 : f32 to vector<16x128xf32>
    %250 = arith.select %246, %248, %249 : vector<16x128xi1>, vector<16x128xf32>
    %251 = arith.addf %244, %250 : vector<16x128xf32>
    %c12_i32 = arith.constant 12 : i32
    %252 = vector.broadcast %c12_i32 : i32 to vector<16x128xi32>
    %253 = arith.cmpi eq, %166, %252 : vector<16x128xi32>
    %cst_116 = arith.constant 0.000000e+00 : f32
    %254 = vector.shape_cast %121 : vector<1x128xf32> to vector<1x128xf32>
    %255 = vector.broadcast %254 : vector<1x128xf32> to vector<16x128xf32>
    %256 = vector.broadcast %cst_116 : f32 to vector<16x128xf32>
    %257 = arith.select %253, %255, %256 : vector<16x128xi1>, vector<16x128xf32>
    %258 = arith.addf %251, %257 : vector<16x128xf32>
    %c13_i32 = arith.constant 13 : i32
    %259 = vector.broadcast %c13_i32 : i32 to vector<16x128xi32>
    %260 = arith.cmpi eq, %166, %259 : vector<16x128xi32>
    %cst_117 = arith.constant 0.000000e+00 : f32
    %261 = vector.shape_cast %135 : vector<1x128xf32> to vector<1x128xf32>
    %262 = vector.broadcast %261 : vector<1x128xf32> to vector<16x128xf32>
    %263 = vector.broadcast %cst_117 : f32 to vector<16x128xf32>
    %264 = arith.select %260, %262, %263 : vector<16x128xi1>, vector<16x128xf32>
    %265 = arith.addf %258, %264 : vector<16x128xf32>
    %c14_i32 = arith.constant 14 : i32
    %266 = vector.broadcast %c14_i32 : i32 to vector<16x128xi32>
    %267 = arith.cmpi eq, %166, %266 : vector<16x128xi32>
    %cst_118 = arith.constant 0.000000e+00 : f32
    %268 = vector.shape_cast %149 : vector<1x128xf32> to vector<1x128xf32>
    %269 = vector.broadcast %268 : vector<1x128xf32> to vector<16x128xf32>
    %270 = vector.broadcast %cst_118 : f32 to vector<16x128xf32>
    %271 = arith.select %267, %269, %270 : vector<16x128xi1>, vector<16x128xf32>
    %272 = arith.addf %265, %271 : vector<16x128xf32>
    %c15_i32 = arith.constant 15 : i32
    %273 = vector.broadcast %c15_i32 : i32 to vector<16x128xi32>
    %274 = arith.cmpi eq, %166, %273 : vector<16x128xi32>
    %cst_119 = arith.constant 0.000000e+00 : f32
    %275 = vector.shape_cast %163 : vector<1x128xf32> to vector<1x128xf32>
    %276 = vector.broadcast %275 : vector<1x128xf32> to vector<16x128xf32>
    %277 = vector.broadcast %cst_119 : f32 to vector<16x128xf32>
    %278 = arith.select %274, %276, %277 : vector<16x128xi1>, vector<16x128xf32>
    %279 = arith.addf %272, %278 : vector<16x128xf32>
    %c0_120 = arith.constant 0 : index
    %c0_121 = arith.constant 0 : index
    %c0_122 = arith.constant 0 : index
    %c0_123 = arith.constant 0 : index
    %280 = vector.load %arg5[%c0_120, %c0_121, %c0_122, %c0_123] : memref<1x1x16x128xf32, #tpu.memory_space<vmem>>, vector<1x1x16x128xf32>
    %281 = vector.shape_cast %279 : vector<16x128xf32> to vector<1x1x16x128xf32>
    %282 = arith.addf %280, %281 : vector<1x1x16x128xf32>
    %c0_124 = arith.constant 0 : index
    %c0_125 = arith.constant 0 : index
    %c0_126 = arith.constant 0 : index
    %c0_127 = arith.constant 0 : index
    %283 = vector.load %arg5[%c0_124, %c0_125, %c0_126, %c0_127] : memref<1x1x16x128xf32, #tpu.memory_space<vmem>>, vector<1x1x16x128xf32>
    tpu.vector_store %arg5[%c0_124, %c0_125, %c0_126, %c0_127], %282 {strides = array<i32>} : memref<1x1x16x128xf32, #tpu.memory_space<vmem>>, vector<1x1x16x128xf32>,
    return
  }
  func.func @transform_0(%arg0: i32, %arg1: i32, %arg2: i32) -> (i32, i32, i32, i32) {
    %c1_i32 = arith.constant 1 : i32
    %0 = arith.muli %arg1, %c1_i32 : i32
    %1 = arith.addi %0, %arg2 : i32
    %c0_i32 = arith.constant 0 : i32
    %c0_i32_0 = arith.constant 0 : i32
    %c0_i32_1 = arith.constant 0 : i32
    return %arg0, %c0_i32, %1, %c0_i32_0 : i32, i32, i32, i32
  }
  func.func @transform_1(%arg0: i32, %arg1: i32, %arg2: i32) -> (i32, i32, i32) {
    %c1_i32 = arith.constant 1 : i32
    %0 = arith.muli %arg1, %c1_i32 : i32
    %1 = arith.addi %0, %arg2 : i32
    %c0_i32 = arith.constant 0 : i32
    %c0_i32_0 = arith.constant 0 : i32
    return %arg0, %1, %c0_i32 : i32, i32, i32
  }
  func.func @transform_2(%arg0: i32, %arg1: i32, %arg2: i32) -> (i32, i32, i32, i32) {
    %c0_i32 = arith.constant 0 : i32
    %c0_i32_0 = arith.constant 0 : i32
    %c0_i32_1 = arith.constant 0 : i32
    return %arg0, %arg1, %c0_i32, %c0_i32_0 : i32, i32, i32, i32
  }
}

</mosaic_0001>

<llo_original>
// kernel: tpu_custom_call.1
$region0: #{tpu_custom_call.1}
  #allocation0 [shape = 'u32[]', space=smem, size = 0x4, offset = 0x4, fixed_abs, tag = 'smem constant byte address 0x4 - core index']
  #allocation1 [shape = 'u32[144,128]{1,0:T(1,128)}', space=vmem, size = 0x12000, scoped, tag = 'internal scratch']
  #allocation2 [shape = 'f32[5,2,128]{2,1,0:T(2,128)}', space=vmem, size = 0x1400, scoped, tag = 'scratch operand']
  %s0 = inlined_call_operand.hbm [shape: f32[2,5,2,128], index: 0, kind: input, shape index: {}]
  %s1 = inlined_call_operand.hbm [shape: s32[2,2,128], index: 1, kind: input, shape index: {}]
  %s2 = inlined_call_operand.hbm [shape: f32[2,1,16,128], index: 2, kind: output, shape index: {}]
  %s3 = sld [smem:[#allocation0]]
  $region53: #{tpu_custom_call.1} parent=0
    _
  %s5 = ssub.s32 1, %s3
  %s6 = scalar_select 0, %s5, %s3
  $region1: #{tpu_custom_call.1} parent=0
    #allocation3 [shape = 'u8[10240]{0}', space=vmem, size = 0x2800, scoped, tag = 'input window, operand 0']
    #allocation4 [shape = 's32[2]{0}', space=sflag, size = 0x8, scoped, tag = 'scoped memory for tpu_custom_call.1']
    #allocation5 [shape = 's32[2]{0}', space=sflag, size = 0x8, scoped, tag = 'scoped memory for tpu_custom_call.1']
    #allocation6 [shape = 'u8[2048]{0}', space=vmem, size = 0x800, scoped, tag = 'input window, operand 1']
    #allocation7 [shape = 's32[2]{0}', space=sflag, size = 0x8, scoped, tag = 'scoped memory for tpu_custom_call.1']
    #allocation8 [shape = 'u8[16384]{0}', space=vmem, size = 0x4000, scoped, tag = 'output window, operand 0']
    %7 = vsyncpa [#allocation4], 0
    %s8 = scalar_lea.sflag [#allocation4], 1
    %9 = vsyncpa %s8, 0
    %10 = vsyncpa [#allocation7], 0
    %s11 = scalar_lea.sflag [#allocation7], 1
    %12 = vsyncpa %s11, 0
    %13 = vsyncpa [#allocation5], 0
    %s14 = scalar_lea.sflag [#allocation5], 1
    %15 = vsyncpa %s14, 0
    loop: start=0, step=1, limit=4
    $region2: #{tpu_custom_call.1} parent=1 // loop_pre_header
      _
    $region3: #{tpu_custom_call.1} parent=1 // loop_header
      %s17 = sphi 0, %s21
      %p18 = scmp.ge.s32.totalorder %s17, 4
      %s24 = sphi 0, %s43
      %s25 = sphi 0, %s39
      %s26 = sphi 0, %s35
      %s27 = sphi 0, %s24
      %s28 = sphi 0, %s25
      %s29 = sphi 0, %s26
      %s30 = sphi 0, %s27
      %s31 = sphi 0, %s28
      %s32 = sphi 0, %s29
      %s50 = sphi 0, %s52
      %s53 = sphi 0, %s50
      %s54 = sphi 0, %s53
      %s70 = sphi 0, %s54
      %s80 = sphi 0, %s82
      %s83 = sphi 0, %s80
      %s84 = sphi 0, %s83
      %s100 = sphi 0, %s84
      %s108 = sphi 0, %s110
      %s111 = sphi 0, %s108
      %s112 = sphi 0, %s111
      %s128 = sphi 0, %s112
    $region4: #{tpu_custom_call.1} parent=1 // loop_header_branch
      %20 = sbr.rel (%p18) target = $region8
    $region5: #{tpu_custom_call.1} parent=1 // loop_body
      %s22 = ssub.s32 %s17, 1
      %s23 = ssub.s32 %s17, 2
      %s33 = sadd.s32 1, %s26
      %p34 = scmp.ge.s32.totalorder %s33, 1
      %s35 = scalar_select %p34, 0, %s33
      %s36 = sadd.s32 1, %s25
      %s37 = scalar_select %p34, %s36, %s25
      %p38 = scmp.ge.s32.totalorder %s37, 1
      %s39 = scalar_select %p38, 0, %s37
      %s40 = sadd.s32 1, %s24
      %s41 = scalar_select %p38, %s40, %s24
      %p42 = scmp.ge.s32.totalorder %s41, 2
      %s43 = scalar_select %p42, 0, %s41
      %s44 = sadd.s32 %s25, %s26
      %s45 = sadd.s32 %s39, %s35
      %s46 = ssub.s32 %s24, %s43
      %s47 = ssub.s32 %s44, %s45
      %s48 = sor.u32 %s46, %s47
      %p49 = scmp.eq.s32.totalorder %s48, 0
      %s51 = sadd.s32 %s50, 1
      %s52 = scalar_select %p49, %s50, %s51
      %p55 = pneg %p49
      %p56 = scmp.eq.s32.totalorder %s17, 1
      %p57 = por %p55, %p56
      %p58 = scmp.ne.s32.totalorder %s50, %s53
      %p59 = scmp.eq.s32.totalorder %s17, 0
      %p60 = por %p58, %p59
      %p61 = scmp.ne.s32.totalorder %s50, %s53
      %p62 = scmp.eq.s32.totalorder %s22, 1
      %p63 = por %p61, %p62
      %p64 = scmp.ne.s32.totalorder %s53, %s54
      %p65 = scmp.eq.s32.totalorder %s22, 0
      %p66 = por %p64, %p65
      %p67 = scmp.ne.s32.totalorder %s53, %s54
      %p68 = scmp.eq.s32.totalorder %s23, 1
      %p69 = por %p67, %p68
      %p71 = scmp.ne.s32.totalorder %s54, %s70
      %p72 = scmp.eq.s32.totalorder %s23, 0
      %p73 = por %p71, %p72
      %s74 = sadd.s32 %s25, %s26
      %s75 = sadd.s32 %s39, %s35
      %s76 = ssub.s32 %s24, %s43
      %s77 = ssub.s32 %s74, %s75
      %s78 = sor.u32 %s76, %s77
      %p79 = scmp.eq.s32.totalorder %s78, 0
      %s81 = sadd.s32 %s80, 1
      %s82 = scalar_select %p79, %s80, %s81
      %p85 = pneg %p79
      %p86 = scmp.eq.s32.totalorder %s17, 1
      %p87 = por %p85, %p86
      %p88 = scmp.ne.s32.totalorder %s80, %s83
      %p89 = scmp.eq.s32.totalorder %s17, 0
      %p90 = por %p88, %p89
      %p91 = scmp.ne.s32.totalorder %s80, %s83
      %p92 = scmp.eq.s32.totalorder %s22, 1
      %p93 = por %p91, %p92
      %p94 = scmp.ne.s32.totalorder %s83, %s84
      %p95 = scmp.eq.s32.totalorder %s22, 0
      %p96 = por %p94, %p95
      %p97 = scmp.ne.s32.totalorder %s83, %s84
      %p98 = scmp.eq.s32.totalorder %s23, 1
      %p99 = por %p97, %p98
      %p101 = scmp.ne.s32.totalorder %s84, %s100
      %p102 = scmp.eq.s32.totalorder %s23, 0
      %p103 = por %p101, %p102
      %s104 = ssub.s32 %s24, %s43
      %s105 = ssub.s32 %s25, %s39
      %s106 = sor.u32 %s104, %s105
      %p107 = scmp.eq.s32.totalorder %s106, 0
      %s109 = sadd.s32 %s108, 1
      %s110 = scalar_select %p107, %s108, %s109
      %p113 = pneg %p107
      %p114 = scmp.eq.s32.totalorder %s17, 1
      %p115 = por %p113, %p114
      %p116 = scmp.ne.s32.totalorder %s108, %s111
      %p117 = scmp.eq.s32.totalorder %s17, 0
      %p118 = por %p116, %p117
      %p119 = scmp.ne.s32.totalorder %s108, %s111
      %p120 = scmp.eq.s32.totalorder %s22, 1
      %p121 = por %p119, %p120
      %p122 = scmp.ne.s32.totalorder %s111, %s112
      %p123 = scmp.eq.s32.totalorder %s22, 0
      %p124 = por %p122, %p123
      %p125 = scmp.ne.s32.totalorder %s111, %s112
      %p126 = scmp.eq.s32.totalorder %s23, 1
      %p127 = por %p125, %p126
      %p129 = scmp.ne.s32.totalorder %s112, %s128
      %p130 = scmp.eq.s32.totalorder %s23, 0
      %p131 = por %p129, %p130
      %p132 = scmp.le.s32.totalorder 1, %s17
      %p133 = scmp.lt.s32.totalorder %s17, 3
      %p134 = pnand %p132, %p133
      %p135 = pneg %p134
      // Predicated region
      $region9: #{tpu_custom_call.1} parent=5 // pred_check
        _
      $region10: #{tpu_custom_call.1} parent=5 // pred_check_branch
        %137 = sbr.rel (%p134) target = $region12
      $region11: #{tpu_custom_call.1} parent=5 // pred_region
        %s138 = ssub.s32 %s17, 1
      $region12: #{tpu_custom_call.1} parent=5 // pred_fallthru
        _
      %p139 = scmp.lt.s32.totalorder %s17, 2
      // Predicated region
      $region13: #{tpu_custom_call.1} parent=5 // pred_check
        %p140 = pneg %p139
      $region14: #{tpu_custom_call.1} parent=5 // pred_check_branch
        %142 = sbr.rel (%p140) target = $region16
      $region15: #{tpu_custom_call.1} parent=5 // pred_region
        // Predicated region
        $region17: #{tpu_custom_call.1} parent=15 // pred_check
          %p143 = pneg %p60
        $region18: #{tpu_custom_call.1} parent=15 // pred_check_branch
          %145 = sbr.rel (%p143) target = $region20
        $region19: #{tpu_custom_call.1} parent=15 // pred_region
          %s146 = sand.u32 %s50, 1
          %s147 = scalar_lea.sflag [#allocation4], %s146
          %s148 = sand.u32 %s50, 1
          %s149 = smul.addr %s148, 10
          %s150 = scalar_lea.vmem [#allocation3], %s149
          %s151 = sadd.s32 %s25, %s26
          %s153 = ssub.s32 160, 160
          %154 = vsyncadd %s147, %s153
          %s155 = smul.addr %s24, 5
          %s156 = sadd.s32 %s151, %s155
          %s157 = smul.addr %s156, 32
          %s158 = scalar_lea.hbm %s0, %s157
          %s159 = sshll.u32 %s150, 4
          %s160 = int_to_ptr.vmem [resolvable:$true] %s159
          %165 = dma.hbm_to_vmem [thread:$0]  %s158, 160, %s160, %s147, 32, 32, 2
        $region20: #{tpu_custom_call.1} parent=15 // pred_fallthru
          _
        // Predicated region
        $region21: #{tpu_custom_call.1} parent=15 // pred_check
          %p166 = pneg %p90
        $region22: #{tpu_custom_call.1} parent=15 // pred_check_branch
          %168 = sbr.rel (%p166) target = $region24
        $region23: #{tpu_custom_call.1} parent=15 // pred_region
          %s169 = sand.u32 %s80, 1
          %s170 = scalar_lea.sflag [#allocation7], %s169
          %s171 = sand.u32 %s80, 1
          %s172 = smul.addr %s171, 2
          %s173 = scalar_lea.vmem [#allocation6], %s172
          %s174 = sadd.s32 %s25, %s26
          %s176 = ssub.s32 32, 32
          %177 = vsyncadd %s170, %s176
          %s178 = sadd.s32 %s174, %s24
          %s179 = smul.addr %s178, 32
          %s180 = scalar_lea.hbm %s1, %s179
          %s182 = sshll.u32 %s173, 4
          %s183 = int_to_ptr.vmem [resolvable:$true] %s182
          %185 = dma.hbm_to_vmem [thread:$0]  %s180, 32, %s183, %s170
        $region24: #{tpu_custom_call.1} parent=15 // pred_fallthru
          _
      $region16: #{tpu_custom_call.1} parent=5 // pred_fallthru
        _
      %p186 = scmp.le.s32.totalorder 1, %s17
      %p187 = scmp.lt.s32.totalorder %s17, 3
      %p188 = pnand %p186, %p187
      %p189 = pneg %p188
      // Predicated region
      $region25: #{tpu_custom_call.1} parent=5 // pred_check
        _
      $region26: #{tpu_custom_call.1} parent=5 // pred_check_branch
        %191 = sbr.rel (%p188) target = $region28
      $region27: #{tpu_custom_call.1} parent=5 // pred_region
        %s192 = ssub.s32 %s17, 1
        %s193 = sand.u32 %s53, 1
        %s194 = scalar_lea.sflag [#allocation4], %s193
        %s195 = sand.u32 %s53, 1
        %s196 = smul.addr %s195, 10
        %s197 = scalar_lea.vmem [#allocation3], %s196
        // Predicated region
        $region29: #{tpu_custom_call.1} parent=27 // pred_check
          %p198 = pneg %p66
        $region30: #{tpu_custom_call.1} parent=27 // pred_check_branch
          %200 = sbr.rel (%p198) target = $region32
        $region31: #{tpu_custom_call.1} parent=27 // pred_region
          %201 = dma.done %s194, 160
        $region32: #{tpu_custom_call.1} parent=27 // pred_fallthru
          _
        %s202 = sand.u32 %s83, 1
        %s203 = scalar_lea.sflag [#allocation7], %s202
        %s204 = sand.u32 %s83, 1
        %s205 = smul.addr %s204, 2
        %s206 = scalar_lea.vmem [#allocation6], %s205
        // Predicated region
        $region33: #{tpu_custom_call.1} parent=27 // pred_check
          %p207 = pneg %p96
        $region34: #{tpu_custom_call.1} parent=27 // pred_check_branch
          %209 = sbr.rel (%p207) target = $region36
        $region35: #{tpu_custom_call.1} parent=27 // pred_region
          %210 = dma.done %s203, 32
        $region36: #{tpu_custom_call.1} parent=27 // pred_fallthru
          _
        %s211 = sand.u32 %s53, 1
        %s212 = scalar_lea.sflag [#allocation4], %s211
        %s213 = sand.u32 %s53, 1
        %s214 = smul.addr %s213, 10
        %s215 = scalar_lea.vmem [#allocation3], %s214
        %p216 = pneg %p66
        %p217 = pneg %p63
        %s218 = sand.u32 %s83, 1
        %s219 = scalar_lea.sflag [#allocation7], %s218
        %s220 = sand.u32 %s83, 1
        %s221 = smul.addr %s220, 2
        %s222 = scalar_lea.vmem [#allocation6], %s221
        %p223 = pneg %p96
        %p224 = pneg %p93
        %p225 = pneg %p124
        %p226 = pneg %p121
        %s227 = sand.u32 %s111, 1
        %s228 = scalar_lea.sflag [#allocation5], %s227
        %s229 = sand.u32 %s111, 1
        %s230 = smul.addr %s229, 16
        %s231 = scalar_lea.vmem [#allocation8], %s230
        %s232 = sadd.s32 %s28, %s29
        %s233 = sadd.s32 %s28, %s29
        %p234 = scmp.eq.s32.totalorder %s29, 0
        // Predicated region
        $region37: #{tpu_custom_call.1} parent=27 // pred_check
          %p235 = pneg %p234
        $region38: #{tpu_custom_call.1} parent=27 // pred_check_branch
          %237 = sbr.rel (%p235) target = $region40
        $region39: #{tpu_custom_call.1} parent=27 // pred_region
          %238 = vst [vmem:[%s231] sm:$0xff] 0.0
          %239 = vst [vmem:[%s231 + $0x8] sm:$0xff] 0.0
        $region40: #{tpu_custom_call.1} parent=27 // pred_fallthru
          _
        %v240 = vld [vmem:[%s206] sm:$0x3]
        %v241 = vld [vmem:[%s197] sm:$0x3]
        %s242 = scalar_lea.vmem %s197, 2 [#allocation3]
        %v243 = vld [vmem:[%s242] sm:$0x3]
        %v244 = vmax.f32 %v241, %v243
        %s245 = scalar_lea.vmem %s197, 4 [#allocation3]
        %v246 = vld [vmem:[%s245] sm:$0x3]
        %v247 = vmax.f32 %v244, %v246
        %s248 = scalar_lea.vmem %s197, 6 [#allocation3]
        %v249 = vld [vmem:[%s248] sm:$0x3]
        %v250 = vmax.f32 %v247, %v249
        %s251 = scalar_lea.vmem %s197, 8 [#allocation3]
        %v252 = vld [vmem:[%s251] sm:$0x3]
        %v253 = vmax.f32 %v250, %v252
        %v254 = vsub.f32 %v241, %v253
        %v255 = vmul.f32 %v254, 1.442695
        %v256 = vpow.pop %v255
        %257 = vst [vmem:[#allocation2] sm:$0x3] %v256
        %v258 = vadd.f32 %v256, 0.0
        %vm259 = vcmp.eq.s32.totalorder %v240, 0
        %v260 = vsel %vm259, %v241, 0.0
        %v261 = vadd.f32 %v260, 0.0
        %v262 = vld [vmem:[%s242] sm:$0x3]
        %v263 = vsub.f32 %v262, %v253
        %v264 = vmul.f32 %v263, 1.442695
        %v265 = vpow.pop %v264
        %s266 = scalar_lea.vmem [#allocation2], 2
        %267 = vst [vmem:[%s266] sm:$0x3] %v265
        %v268 = vadd.f32 %v258, %v265
        %vm269 = vcmp.eq.s32.totalorder %v240, 1
        %v270 = vsel %vm269, %v262, 0.0
        %v271 = vadd.f32 %v261, %v270
        %v272 = vld [vmem:[%s245] sm:$0x3]
        %v273 = vsub.f32 %v272, %v253
        %v274 = vmul.f32 %v273, 1.442695
        %v275 = vpow.pop %v274
        %s276 = scalar_lea.vmem [#allocation2], 4
        %277 = vst [vmem:[%s276] sm:$0x3] %v275
        %v278 = vadd.f32 %v268, %v275
        %vm279 = vcmp.eq.s32.totalorder %v240, 2
        %v280 = vsel %vm279, %v272, 0.0
        %v281 = vadd.f32 %v271, %v280
        %v282 = vld [vmem:[%s248] sm:$0x3]
        %v283 = vsub.f32 %v282, %v253
        %v284 = vmul.f32 %v283, 1.442695
        %v285 = vpow.pop %v284
        %s286 = scalar_lea.vmem [#allocation2], 6
        %287 = vst [vmem:[%s286] sm:$0x3] %v285
        %v288 = vadd.f32 %v278, %v285
        %vm289 = vcmp.eq.s32.totalorder %v240, 3
        %v290 = vsel %vm289, %v282, 0.0
        %v291 = vadd.f32 %v281, %v290
        %v292 = vld [vmem:[%s251] sm:$0x3]
        %v293 = vsub.f32 %v292, %v253
        %v294 = vmul.f32 %v293, 1.442695
        %v295 = vpow.pop %v294
        %s296 = scalar_lea.vmem [#allocation2], 8
        %297 = vst [vmem:[%s296] sm:$0x3] %v295
        %v298 = vadd.f32 %v288, %v295
        %vm299 = vcmp.eq.s32.totalorder %v240, 4
        %v300 = vsel %vm299, %v292, 0.0
        %v301 = vadd.f32 %v291, %v300
        %v302 = vlog2.pop %v298
        %v303 = vmul.f32 %v302, 0.6931472
        %v304 = vrcp.pop %v298
        %v305 = vmul.f32 %v298, %v304
        %v306 = vsub.f32 2.0, %v305
        %v307 = vmul.f32 %v304, %v306
        %v308 = vadd.f32 %v253, %v303
        %v309 = vsub.f32 %v308, %v301
        %v310 = vld [vmem:[#allocation2] sm:$0x3]
        %v311 = vmul.f32 %v310, %v307
        %v312 = vsel %vm259, 1, 0
        %v313 = vcvt.s32.f32 %v312
        %v314 = vmul.f32 %v311, %v313
        %vm315 = vcmask 1041408
        %v316 = vsel %vm315, %v314, 0.0
        %v317 = vrot.slane %v316, 4
        %v318 = vadd.f32 %v316, %v317
        %v319 = vrot.slane %v318, 2
        %v320 = vadd.f32 %v318, %v319
        %v321 = vrot.slane %v320, 1
        %v322 = vadd.f32 %v320, %v321
        %v323 = vsel %vm315, %v311, 0.0
        %v324 = vrot.slane %v323, 4
        %v325 = vadd.f32 %v323, %v324
        %v326 = vrot.slane %v325, 2
        %v327 = vadd.f32 %v325, %v326
        %v328 = vrot.slane %v327, 1
        %v329 = vadd.f32 %v327, %v328
        %v330 = vsel %vm315, %v313, 0.0
        %v331 = vrot.slane %v330, 4
        %v332 = vadd.f32 %v330, %v331
        %v333 = vrot.slane %v332, 2
        %v334 = vadd.f32 %v332, %v333
        %v335 = vrot.slane %v334, 1
        %v336 = vadd.f32 %v334, %v335
        %v337 = vld [vmem:[%s266] sm:$0x3]
        %v338 = vmul.f32 %v337, %v307
        %v339 = vsel %vm269, 1, 0
        %v340 = vcvt.s32.f32 %v339
        %v341 = vmul.f32 %v338, %v340
        %v342 = vsel %vm315, %v341, 0.0
        %v343 = vrot.slane %v342, 4
        %v344 = vadd.f32 %v342, %v343
        %v345 = vrot.slane %v344, 2
        %v346 = vadd.f32 %v344, %v345
        %v347 = vrot.slane %v346, 1
        %v348 = vadd.f32 %v346, %v347
        %v349 = vsel %vm315, %v338, 0.0
        %v350 = vrot.slane %v349, 4
        %v351 = vadd.f32 %v349, %v350
        %v352 = vrot.slane %v351, 2
        %v353 = vadd.f32 %v351, %v352
        %v354 = vrot.slane %v353, 1
        %v355 = vadd.f32 %v353, %v354
        %v356 = vsel %vm315, %v340, 0.0
        %v357 = vrot.slane %v356, 4
        %v358 = vadd.f32 %v356, %v357
        %v359 = vrot.slane %v358, 2
        %v360 = vadd.f32 %v358, %v359
        %v361 = vrot.slane %v360, 1
        %v362 = vadd.f32 %v360, %v361
        %v363 = vld [vmem:[%s276] sm:$0x3]
        %v364 = vmul.f32 %v363, %v307
        %v365 = vsel %vm279, 1, 0
        %v366 = vcvt.s32.f32 %v365
        %v367 = vmul.f32 %v364, %v366
        %v368 = vsel %vm315, %v367, 0.0
        %v369 = vrot.slane %v368, 4
        %v370 = vadd.f32 %v368, %v369
        %v371 = vrot.slane %v370, 2
        %v372 = vadd.f32 %v370, %v371
        %v373 = vrot.slane %v372, 1
        %v374 = vadd.f32 %v372, %v373
        %v375 = vsel %vm315, %v364, 0.0
        %v376 = vrot.slane %v375, 4
        %v377 = vadd.f32 %v375, %v376
        %v378 = vrot.slane %v377, 2
        %v379 = vadd.f32 %v377, %v378
        %v380 = vrot.slane %v379, 1
        %v381 = vadd.f32 %v379, %v380
        %v382 = vsel %vm315, %v366, 0.0
        %v383 = vrot.slane %v382, 4
        %v384 = vadd.f32 %v382, %v383
        %v385 = vrot.slane %v384, 2
        %v386 = vadd.f32 %v384, %v385
        %v387 = vrot.slane %v386, 1
        %v388 = vadd.f32 %v386, %v387
        %v389 = vld [vmem:[%s286] sm:$0x3]
        %v390 = vmul.f32 %v389, %v307
        %v391 = vsel %vm289, 1, 0
        %v392 = vcvt.s32.f32 %v391
        %v393 = vmul.f32 %v390, %v392
        %v394 = vsel %vm315, %v393, 0.0
        %v395 = vrot.slane %v394, 4
        %v396 = vadd.f32 %v394, %v395
        %v397 = vrot.slane %v396, 2
        %v398 = vadd.f32 %v396, %v397
        %v399 = vrot.slane %v398, 1
        %v400 = vadd.f32 %v398, %v399
        %v401 = vsel %vm315, %v390, 0.0
        %v402 = vrot.slane %v401, 4
        %v403 = vadd.f32 %v401, %v402
        %v404 = vrot.slane %v403, 2
        %v405 = vadd.f32 %v403, %v404
        %v406 = vrot.slane %v405, 1
        %v407 = vadd.f32 %v405, %v406
        %v408 = vsel %vm315, %v392, 0.0
        %v409 = vrot.slane %v408, 4
        %v410 = vadd.f32 %v408, %v409
        %v411 = vrot.slane %v410, 2
        %v412 = vadd.f32 %v410, %v411
        %v413 = vrot.slane %v412, 1
        %v414 = vadd.f32 %v412, %v413
        %v415 = vld [vmem:[%s296] sm:$0x3]
        %v416 = vmul.f32 %v415, %v307
        %v417 = vsel %vm299, 1, 0
        %v418 = vcvt.s32.f32 %v417
        %v419 = vmul.f32 %v416, %v418
        %v420 = vsel %vm315, %v419, 0.0
        %v421 = vrot.slane %v420, 4
        %v422 = vadd.f32 %v420, %v421
        %v423 = vrot.slane %v422, 2
        %v424 = vadd.f32 %v422, %v423
        %v425 = vrot.slane %v424, 1
        %v426 = vadd.f32 %v424, %v425
        %v427 = vsel %vm315, %v416, 0.0
        %v428 = vrot.slane %v427, 4
        %v429 = vadd.f32 %v427, %v428
        %v430 = vrot.slane %v429, 2
        %v431 = vadd.f32 %v429, %v430
        %v432 = vrot.slane %v431, 1
        %v433 = vadd.f32 %v431, %v432
        %v434 = vsel %vm315, %v418, 0.0
        %v435 = vrot.slane %v434, 4
        %v436 = vadd.f32 %v434, %v435
        %v437 = vrot.slane %v436, 2
        %v438 = vadd.f32 %v436, %v437
        %v439 = vrot.slane %v438, 1
        %v440 = vadd.f32 %v438, %v439
        %v441 = vsel %vm315, %v309, 0.0
        %v442 = vrot.slane %v441, 4
        %v443 = vadd.f32 %v441, %v442
        %v444 = vrot.slane %v443, 2
        %v445 = vadd.f32 %v443, %v444
        %v446 = vrot.slane %v445, 1
        %v447 = vadd.f32 %v445, %v446
        %v448 = vlaneseq
        %v449 = vshrl.u32 %v448, 7
        %v450 = vadd.s32 %v449, 8
        %vm451 = vcmp.eq.s32.totalorder %v449, 0
        %vm452 = vcmp.eq.s32.totalorder %v450, 0
        %v453 = vsel %vm451, %v447, 0.0
        %v454 = vsel %vm452, %v447, 0.0
        %v455 = vadd.f32 %v453, 0.0
        %v456 = vadd.f32 %v454, 0.0
        %vm457 = vcmp.eq.s32.totalorder %v449, 1
        %vm458 = vcmp.eq.s32.totalorder %v450, 1
        %v459 = vsel %vm457, %v322, 0.0
        %v460 = vsel %vm458, %v322, 0.0
        %v461 = vadd.f32 %v455, %v459
        %v462 = vadd.f32 %v456, %v460
        %vm463 = vcmp.eq.s32.totalorder %v449, 2
        %vm464 = vcmp.eq.s32.totalorder %v450, 2
        %v465 = vsel %vm463, %v348, 0.0
        %v466 = vsel %vm464, %v348, 0.0
        %v467 = vadd.f32 %v461, %v465
        %v468 = vadd.f32 %v462, %v466
        %vm469 = vcmp.eq.s32.totalorder %v449, 3
        %vm470 = vcmp.eq.s32.totalorder %v450, 3
        %v471 = vsel %vm469, %v374, 0.0
        %v472 = vsel %vm470, %v374, 0.0
        %v473 = vadd.f32 %v467, %v471
        %v474 = vadd.f32 %v468, %v472
        %vm475 = vcmp.eq.s32.totalorder %v449, 4
        %vm476 = vcmp.eq.s32.totalorder %v450, 4
        %v477 = vsel %vm475, %v400, 0.0
        %v478 = vsel %vm476, %v400, 0.0
        %v479 = vadd.f32 %v473, %v477
        %v480 = vadd.f32 %v474, %v478
        %vm481 = vcmp.eq.s32.totalorder %v449, 5
        %vm482 = vcmp.eq.s32.totalorder %v450, 5
        %v483 = vsel %vm481, %v426, 0.0
        %v484 = vsel %vm482, %v426, 0.0
        %v485 = vadd.f32 %v479, %v483
        %v486 = vadd.f32 %v480, %v484
        %vm487 = vcmp.eq.s32.totalorder %v449, 6
        %vm488 = vcmp.eq.s32.totalorder %v450, 6
        %v489 = vsel %vm487, %v329, 0.0
        %v490 = vsel %vm488, %v329, 0.0
        %v491 = vadd.f32 %v485, %v489
        %v492 = vadd.f32 %v486, %v490
        %vm493 = vcmp.eq.s32.totalorder %v449, 7
        %vm494 = vcmp.eq.s32.totalorder %v450, 7
        %v495 = vsel %vm493, %v355, 0.0
        %v496 = vsel %vm494, %v355, 0.0
        %v497 = vadd.f32 %v491, %v495
        %v498 = vadd.f32 %v492, %v496
        %vm499 = vcmp.eq.s32.totalorder %v449, 8
        %vm500 = vcmp.eq.s32.totalorder %v450, 8
        %v501 = vsel %vm499, %v381, 0.0
        %v502 = vsel %vm500, %v381, 0.0
        %v503 = vadd.f32 %v497, %v501
        %v504 = vadd.f32 %v498, %v502
        %vm505 = vcmp.eq.s32.totalorder %v449, 9
        %vm506 = vcmp.eq.s32.totalorder %v450, 9
        %v507 = vsel %vm505, %v407, 0.0
        %v508 = vsel %vm506, %v407, 0.0
        %v509 = vadd.f32 %v503, %v507
        %v510 = vadd.f32 %v504, %v508
        %vm511 = vcmp.eq.s32.totalorder %v449, 10
        %vm512 = vcmp.eq.s32.totalorder %v450, 10
        %v513 = vsel %vm511, %v433, 0.0
        %v514 = vsel %vm512, %v433, 0.0
        %v515 = vadd.f32 %v509, %v513
        %v516 = vadd.f32 %v510, %v514
        %vm517 = vcmp.eq.s32.totalorder %v449, 11
        %vm518 = vcmp.eq.s32.totalorder %v450, 11
        %v519 = vsel %vm517, %v336, 0.0
        %v520 = vsel %vm518, %v336, 0.0
        %v521 = vadd.f32 %v515, %v519
        %v522 = vadd.f32 %v516, %v520
        %vm523 = vcmp.eq.s32.totalorder %v449, 12
        %vm524 = vcmp.eq.s32.totalorder %v450, 12
        %v525 = vsel %vm523, %v362, 0.0
        %v526 = vsel %vm524, %v362, 0.0
        %v527 = vadd.f32 %v521, %v525
        %v528 = vadd.f32 %v522, %v526
        %vm529 = vcmp.eq.s32.totalorder %v449, 13
        %vm530 = vcmp.eq.s32.totalorder %v450, 13
        %v531 = vsel %vm529, %v388, 0.0
        %v532 = vsel %vm530, %v388, 0.0
        %v533 = vadd.f32 %v527, %v531
        %v534 = vadd.f32 %v528, %v532
        %vm535 = vcmp.eq.s32.totalorder %v449, 14
        %vm536 = vcmp.eq.s32.totalorder %v450, 14
        %v537 = vsel %vm535, %v414, 0.0
        %v538 = vsel %vm536, %v414, 0.0
        %v539 = vadd.f32 %v533, %v537
        %v540 = vadd.f32 %v534, %v538
        %vm541 = vcmp.eq.s32.totalorder %v449, 15
        %vm542 = vcmp.eq.s32.totalorder %v450, 15
        %v543 = vsel %vm541, %v440, 0.0
        %v544 = vsel %vm542, %v440, 0.0
        %v545 = vadd.f32 %v539, %v543
        %v546 = vadd.f32 %v540, %v544
        %v547 = vld [vmem:[%s231] sm:$0xff]
        %v548 = vld [vmem:[%s231 + $0x8] sm:$0xff]
        %v549 = vadd.f32 %v547, %v545
        %v550 = vadd.f32 %v548, %v546
        %551 = vst [vmem:[%s231] sm:$0xff] %v549
        %552 = vst [vmem:[%s231 + $0x8] sm:$0xff] %v550
        %s553 = sand.u32 %s111, 1
        %s554 = scalar_lea.sflag [#allocation5], %s553
        %s555 = sand.u32 %s111, 1
        %s556 = smul.addr %s555, 16
        %s557 = scalar_lea.vmem [#allocation8], %s556
        // Predicated region
        $region41: #{tpu_custom_call.1} parent=27 // pred_check
          %p558 = pneg %p121
        $region42: #{tpu_custom_call.1} parent=27 // pred_check_branch
          %560 = sbr.rel (%p558) target = $region44
        $region43: #{tpu_custom_call.1} parent=27 // pred_region
          %s562 = ssub.s32 256, 256
          %563 = vsyncadd %s554, %s562
          %s564 = smul.addr %s28, 2
          %s565 = smul.addr %s27, 2
          %s566 = sadd.s32 %s564, %s565
          %s567 = smul.addr %s566, 128
          %s568 = scalar_lea.hbm %s2, %s567
          %s569 = sshll.u32 %s557, 4
          %s570 = int_to_ptr.vmem [resolvable:$true] %s569
          %575 = dma.vmem_to_hbm [thread:$0]  %s570, 256, %s568, %s554, 128, 128, 8
        $region44: #{tpu_custom_call.1} parent=27 // pred_fallthru
          _
      $region28: #{tpu_custom_call.1} parent=5 // pred_fallthru
        _
      %p576 = scmp.le.s32.totalorder 2, %s17
      // Predicated region
      $region45: #{tpu_custom_call.1} parent=5 // pred_check
        %p577 = pneg %p576
      $region46: #{tpu_custom_call.1} parent=5 // pred_check_branch
        %579 = sbr.rel (%p577) target = $region48
      $region47: #{tpu_custom_call.1} parent=5 // pred_region
        %s580 = ssub.s32 %s17, 2
        // Predicated region
        $region49: #{tpu_custom_call.1} parent=47 // pred_check
          %p581 = pneg %p127
        $region50: #{tpu_custom_call.1} parent=47 // pred_check_branch
          %583 = sbr.rel (%p581) target = $region52
        $region51: #{tpu_custom_call.1} parent=47 // pred_region
          %s584 = sand.u32 %s112, 1
          %s585 = scalar_lea.sflag [#allocation5], %s584
          %s586 = sand.u32 %s112, 1
          %s587 = smul.addr %s586, 16
          %s588 = scalar_lea.vmem [#allocation8], %s587
          %589 = dma.done %s585, 256
        $region52: #{tpu_custom_call.1} parent=47 // pred_fallthru
          _
      $region48: #{tpu_custom_call.1} parent=5 // pred_fallthru
        _
    $region6: #{tpu_custom_call.1} parent=1 // loop_footer
      %s21 = sadd.s32 1, %s17
    $region7: #{tpu_custom_call.1} parent=1 // loop_footer_branch
      %16 = sbr.rel target = $region3
    $region8: #{tpu_custom_call.1} parent=1 // loop_exit
      _
    %590 = vsyncpa [#allocation4], 1
    %s591 = scalar_lea.sflag [#allocation4], 1
    %592 = vsyncpa %s591, 1
    %593 = vsyncpa [#allocation7], 1
    %s594 = scalar_lea.sflag [#allocation7], 1
    %595 = vsyncpa %s594, 1
    %596 = vsyncpa [#allocation5], 1
    %s597 = scalar_lea.sflag [#allocation5], 1
    %598 = vsyncpa %s597, 1

</llo_original>
